<compile_context>
chip_gen: v7x
topology: tpu7x:2x2x1
jax: 0.10.0
libtpu: 0.0.40
codegen_flags: <defaults>
</compile_context>

<pallas_src>
import functools

import jax
import jax.numpy as jnp
from jax import lax
from jax.experimental import pallas as pl
from jax.experimental.pallas import tpu as pltpu


# ---------------------------------------------------------------------------
# VMEM budget / tile selection (generation-aware)
# ---------------------------------------------------------------------------
def _vmem_budget_bytes():
    """~75% of physical VMEM; conservative 64 MiB (v7x) fallback."""
    phys = 64 * 1024 * 1024
    try:
        cap = getattr(pltpu.get_tpu_info(), "vmem_capacity_bytes", None)
        if cap:
            phys = int(cap)
    except Exception:   # API unavailable -> stay conservative
        pass
    return (phys * 3) // 4


_TM_CANDIDATES = (2048, 1024, 512, 256, 128)   # DMA-amortization driven, not MXU-shape


def _pick_tm_cov(n, m, budget):
    for tm in _TM_CANDIDATES:
        need = 2 * n * tm * 4 + n * n * 4 + n * 4      # 2x f32 x-tile + cov + s_acc
        if m % tm == 0 and need * 5 // 4 < budget:
            return tm
    return m


def _pick_tiles_linear(n, m, o, y_itemsize, budget):
    # O tile: split into two 128-aligned blocks when O is large enough so the second
    # TensorCore (v7x) can take half the W stream; on 1-TC chips the extra grid step
    # is negligible per-step overhead.
    to = o // 2 if (o >= 256 and o % 256 == 0) else o

    def need(tm):
        return (2 * to * tm * 2          # W tile (bf16), double buffered
                + 2 * n * tm * 2         # x tile (bf16), double buffered
                + 2 * to * 4             # bias tile (f32)
                + 2 * n * to * y_itemsize  # y output block
                + n * to * 4)            # f32 accumulator

    for tm in _TM_CANDIDATES:
        if m % tm == 0 and need(tm) * 5 // 4 < budget:
            return to, tm
    return to, m


# ---------------------------------------------------------------------------
# Kernels
# ---------------------------------------------------------------------------
def _cov_kernel(m_total, x_ref, cov_ref, s_acc):
    """cov = (X X^T - s s^T / M) / (M - 1), accumulated over M tiles."""
    k = pl.program_id(0)

    @pl.when(k == 0)
    def _init():
        cov_ref[...] = jnp.zeros_like(cov_ref)
        s_acc[...] = jnp.zeros_like(s_acc)

    xf = x_ref[...].astype(jnp.float32)
    # Contract over the observation axis of both operands: no transposed operand
    # is ever materialized (MXU only, no XLU vxpose).
    cov_ref[...] += lax.dot_general(
        xf, xf, (((1,), (1,)), ((), ())), preferred_element_type=jnp.float32)
    s_acc[...] += jnp.sum(xf, axis=1, keepdims=True)

    @pl.when(k == pl.num_programs(0) - 1)
    def _finalize():
        s = s_acc[...]
        mean_outer = lax.dot_general(
            s, s, (((1,), (1,)), ((), ())), preferred_element_type=jnp.float32)
        m = jnp.float32(m_total)
        cov_ref[...] = (cov_ref[...] - mean_outer / m) / (m - jnp.float32(1.0))


def _linear_kernel(x_ref, w_ref, b_ref, y_ref, y_acc):
    """y[:, o-block] = x @ W[o-block].T + b[o-block], reduced over M tiles."""
    k = pl.program_id(1)

    @pl.when(k == 0)
    def _init():
        y_acc[...] = jnp.zeros_like(y_acc)

    # bf16 MXU operands (cast once in the wrapper, not per grid step); f32 accumulation.
    y_acc[...] += lax.dot_general(
        x_ref[...], w_ref[...], (((1,), (1,)), ((), ())),
        preferred_element_type=jnp.float32)

    @pl.when(k == pl.num_programs(1) - 1)
    def _finalize():
        y_ref[...] = (y_acc[...] + b_ref[...]).astype(y_ref.dtype)


# ---------------------------------------------------------------------------
# Wrapper
# ---------------------------------------------------------------------------
def cov_wrapper_forward(x, w, b):
    """Returns (y, cov): y == Linear(x) == x @ w.T + b, cov == torch.cov(x)."""
    n, m = x.shape
    o = w.shape[0]
    assert w.shape[1] == m and b.shape == (o,)

    budget = _vmem_budget_bytes()

    # ---- covariance call (f32 path; tiny vs the W stream) --------------------
    tm_c = _pick_tm_cov(n, m, budget)
    cov = pl.pallas_call(
        functools.partial(_cov_kernel, float(m)),
        out_shape=jax.ShapeDtypeStruct((n, n), jnp.float32),
        grid_spec=pltpu.PrefetchScalarGridSpec(
            num_scalar_prefetch=0,
            grid=(m // tm_c,),
            in_specs=[pl.BlockSpec((n, tm_c), lambda k: (0, k))],
            out_specs=pl.BlockSpec((n, n), lambda k: (0, 0)),   # resident f32 accumulator
            scratch_shapes=[pltpu.VMEM((n, 1), jnp.float32)],   # row sums
        ),
        compiler_params=pltpu.CompilerParams(
            dimension_semantics=("arbitrary",),
            vmem_limit_bytes=budget,
        ),
        cost_estimate=pl.CostEstimate(
            flops=2 * n * m * n + 2 * n * n,
            transcendentals=0,
            bytes_accessed=x.size * x.dtype.itemsize + n * n * 4),
    )(x)

    # ---- linear call (bf16 stream, f32 accumulation) -------------------------
    x_bf = x.astype(jnp.bfloat16)
    w_bf = w.astype(jnp.bfloat16)
    b2 = b.reshape(1, o).astype(jnp.float32)

    to, tm_l = _pick_tiles_linear(n, m, o, x.dtype.itemsize, budget)
    y = pl.pallas_call(
        _linear_kernel,
        out_shape=jax.ShapeDtypeStruct((n, o), x.dtype),
        grid_spec=pltpu.PrefetchScalarGridSpec(
            num_scalar_prefetch=0,
            grid=(o // to, m // tm_l),
            in_specs=[
                # If profiling shows exposed DMA for large M, sweep
                # pipeline_mode=pl.Buffered(3) on the x / W specs (cheap now W is bf16).
                pl.BlockSpec((n, tm_l), lambda i, k: (0, k)),    # x   (bf16)
                pl.BlockSpec((to, tm_l), lambda i, k: (i, k)),   # W   (bf16, (O, M) layout)
                pl.BlockSpec((1, to), lambda i, k: (0, i)),      # bias (f32)
            ],
            out_specs=pl.BlockSpec((n, to), lambda i, k: (0, i)),
            scratch_shapes=[pltpu.VMEM((n, to), jnp.float32)],   # f32 accumulator
        ),
        compiler_params=pltpu.CompilerParams(
            dimension_semantics=("parallel", "arbitrary"),
            vmem_limit_bytes=budget,
        ),
        cost_estimate=pl.CostEstimate(
            flops=2 * n * m * o,
            transcendentals=0,
            bytes_accessed=(x.size + w.size) * 2 + o * 4 + n * o * x.dtype.itemsize),
    )(x_bf, w_bf, b2)

    return y, cov


if __name__ == "__main__":
    # Small shapes consistent with the module: x is 2-D (torch.cov requires <= 2-D),
    # N=8 variables (rows), M=512 observations (cols); wrapped layer is Linear(512, 512).
    key = jax.random.PRNGKey(0)
    kx, kw, kb = jax.random.split(key, 3)

    N, M, O = 8, 512, 512
    x = jax.random.normal(kx, (N, M), dtype=jnp.float32)
    bound = 1.0 / float(M) ** 0.5
    w = jax.random.uniform(kw, (O, M), dtype=jnp.float32, minval=-bound, maxval=bound)
    b = jax.random.uniform(kb, (O,), dtype=jnp.float32, minval=-bound, maxval=bound)

    y, cov = jax.jit(cov_wrapper_forward)(x, w, b)
    jax.block_until_ready((y, cov))

    # Pure-JAX reference (same math as torch.cov + nn.Linear).
    mean = jnp.mean(x, axis=1, keepdims=True)
    xc = x - mean
    cov_ref = (xc @ xc.T) / (M - 1)
    y_ref = x @ w.T + b

    assert jnp.allclose(cov, cov_ref, atol=1e-3, rtol=1e-3), "cov mismatch"
    # Linear path uses bf16 MXU operands (f32 accumulation) -> looser tolerance.
    assert jnp.allclose(y, y_ref, atol=3e-2, rtol=3e-2), "linear output mismatch"

    print("KERNEL_OK")
</pallas_src>

<mosaic_0001>
module attributes {stable_mosaic.version = 11 : i64} {
  func.func @_linear_kernel(%arg0: i32, %arg1: i32, %arg2: memref<8x512xbf16, #tpu.memory_space<vmem>>, %arg3: memref<256x512xbf16, #tpu.memory_space<vmem>>, %arg4: memref<1x256xf32, #tpu.memory_space<vmem>>, %arg5: memref<8x256xf32, #tpu.memory_space<vmem>>, %arg6: memref<8x256xf32, #tpu.memory_space<vmem>>) attributes {dimension_semantics = [#tpu.dimension_semantics<parallel>, #tpu.dimension_semantics<arbitrary>], iteration_bounds = array<i64: 2, 1>, scalar_prefetch = 0 : i64, scratch_operands = 1 : i64, tpu.core_type = #tpu.core_type<tc>, window_params = [{transform_indices = @transform_0, window_bounds = array<i64: 8, 512>}, {transform_indices = @transform_1, window_bounds = array<i64: 256, 512>}, {transform_indices = @transform_2, window_bounds = array<i64: 1, 256>}, {transform_indices = @transform_3, window_bounds = array<i64: 8, 256>}]} {
    %c0_i32 = arith.constant 0 : i32
    %0 = arith.cmpi eq, %arg1, %c0_i32 : i32
    %1 = arith.extui %0 : i1 to i32
    %c0_i32_0 = arith.constant 0 : i32
    %2 = arith.cmpi ne, %1, %c0_i32_0 : i32
    scf.if %2 {
      %cst_10 = arith.constant 0.000000e+00 : f32
      %12 = vector.broadcast %cst_10 : f32 to vector<8x256xf32>
      %c0_11 = arith.constant 0 : index
      %c0_12 = arith.constant 0 : index
      %13 = vector.load %arg6[%c0_11, %c0_12] : memref<8x256xf32, #tpu.memory_space<vmem>>, vector<8x256xf32>
      tpu.vector_store %arg6[%c0_11, %c0_12], %12 {strides = array<i32>} : memref<8x256xf32, #tpu.memory_space<vmem>>, vector<8x256xf32>,
    } else {
    }
    %c0 = arith.constant 0 : index
    %c0_1 = arith.constant 0 : index
    %3 = vector.load %arg6[%c0, %c0_1] : memref<8x256xf32, #tpu.memory_space<vmem>>, vector<8x256xf32>
    %c0_2 = arith.constant 0 : index
    %c0_3 = arith.constant 0 : index
    %4 = vector.load %arg2[%c0_2, %c0_3] : memref<8x512xbf16, #tpu.memory_space<vmem>>, vector<8x512xbf16>
    %c0_4 = arith.constant 0 : index
    %c0_5 = arith.constant 0 : index
    %5 = vector.load %arg3[%c0_4, %c0_5] : memref<256x512xbf16, #tpu.memory_space<vmem>>, vector<256x512xbf16>
    %cst = arith.constant dense<0.000000e+00> : vector<8x256xf32>
    %6 = tpu.matmul %4, %5, %cst {dimension_numbers = #tpu.dot_dimension_numbers<[1], [1], [0], [0], [0, 0, 1, 0], [], []>} : vector<8x512xbf16>, vector<256x512xbf16>, vector<8x256xf32> -> vector<8x256xf32>
    %7 = arith.addf %3, %6 : vector<8x256xf32>
    %c0_6 = arith.constant 0 : index
    %c0_7 = arith.constant 0 : index
    %8 = vector.load %arg6[%c0_6, %c0_7] : memref<8x256xf32, #tpu.memory_space<vmem>>, vector<8x256xf32>
    tpu.vector_store %arg6[%c0_6, %c0_7], %7 {strides = array<i32>} : memref<8x256xf32, #tpu.memory_space<vmem>>, vector<8x256xf32>,
    %c0_i32_8 = arith.constant 0 : i32
    %9 = arith.cmpi eq, %arg1, %c0_i32_8 : i32
    %10 = arith.extui %9 : i1 to i32
    %c0_i32_9 = arith.constant 0 : i32
    %11 = arith.cmpi ne, %10, %c0_i32_9 : i32
    scf.if %11 {
      %c0_10 = arith.constant 0 : index
      %c0_11 = arith.constant 0 : index
      %12 = vector.load %arg6[%c0_10, %c0_11] : memref<8x256xf32, #tpu.memory_space<vmem>>, vector<8x256xf32>
      %c0_12 = arith.constant 0 : index
      %c0_13 = arith.constant 0 : index
      %13 = vector.load %arg4[%c0_12, %c0_13] : memref<1x256xf32, #tpu.memory_space<vmem>>, vector<1x256xf32>
      %14 = vector.broadcast %13 : vector<1x256xf32> to vector<8x256xf32>
      %15 = arith.addf %12, %14 : vector<8x256xf32>
      %c0_14 = arith.constant 0 : index
      %c0_15 = arith.constant 0 : index
      %16 = vector.load %arg5[%c0_14, %c0_15] : memref<8x256xf32, #tpu.memory_space<vmem>>, vector<8x256xf32>
      tpu.vector_store %arg5[%c0_14, %c0_15], %15 {strides = array<i32>} : memref<8x256xf32, #tpu.memory_space<vmem>>, vector<8x256xf32>,
    } else {
    }
    return
  }
  func.func @transform_0(%arg0: i32, %arg1: i32) -> (i32, i32) {
    %c0_i32 = arith.constant 0 : i32
    %c0_i32_0 = arith.constant 0 : i32
    return %c0_i32, %arg1 : i32, i32
  }
  func.func @transform_1(%arg0: i32, %arg1: i32) -> (i32, i32) {
    %c0_i32 = arith.constant 0 : i32
    return %arg0, %arg1 : i32, i32
  }
  func.func @transform_2(%arg0: i32, %arg1: i32) -> (i32, i32) {
    %c0_i32 = arith.constant 0 : i32
    %c0_i32_0 = arith.constant 0 : i32
    return %c0_i32, %arg0 : i32, i32
  }
  func.func @transform_3(%arg0: i32, %arg1: i32) -> (i32, i32) {
    %c0_i32 = arith.constant 0 : i32
    %c0_i32_0 = arith.constant 0 : i32
    return %c0_i32, %arg0 : i32, i32
  }
}

module attributes {stable_mosaic.version = 11 : i64} {
  func.func @_cov_kernel(%arg0: i32, %arg1: memref<8x512xf32, #tpu.memory_space<vmem>>, %arg2: memref<8x8xf32, #tpu.memory_space<vmem>>, %arg3: memref<8x1xf32, #tpu.memory_space<vmem>>) attributes {dimension_semantics = [#tpu.dimension_semantics<arbitrary>], iteration_bounds = array<i64: 1>, scalar_prefetch = 0 : i64, scratch_operands = 1 : i64, tpu.core_type = #tpu.core_type<tc>, window_params = [{transform_indices = @transform_0, window_bounds = array<i64: 8, 512>}, {pipeline_mode = #tpu.pipeline_mode<synchronous>, transform_indices = @transform_1, window_bounds = array<i64: 8, 8>}]} {
    %c0_i32 = arith.constant 0 : i32
    %0 = arith.cmpi eq, %arg0, %c0_i32 : i32
    %1 = arith.extui %0 : i1 to i32
    %c0_i32_0 = arith.constant 0 : i32
    %2 = arith.cmpi ne, %1, %c0_i32_0 : i32
    scf.if %2 {
      %cst_13 = arith.constant 0.000000e+00 : f32
      %16 = vector.broadcast %cst_13 : f32 to vector<8x8xf32>
      %c0_14 = arith.constant 0 : index
      %c0_15 = arith.constant 0 : index
      %17 = vector.load %arg2[%c0_14, %c0_15] : memref<8x8xf32, #tpu.memory_space<vmem>>, vector<8x8xf32>
      tpu.vector_store %arg2[%c0_14, %c0_15], %16 {strides = array<i32>} : memref<8x8xf32, #tpu.memory_space<vmem>>, vector<8x8xf32>,
      %cst_16 = arith.constant 0.000000e+00 : f32
      %18 = vector.broadcast %cst_16 : f32 to vector<8x1xf32>
      %c0_17 = arith.constant 0 : index
      %c0_18 = arith.constant 0 : index
      %19 = vector.load %arg3[%c0_17, %c0_18] : memref<8x1xf32, #tpu.memory_space<vmem>>, vector<8x1xf32>
      tpu.vector_store %arg3[%c0_17, %c0_18], %18 {strides = array<i32>} : memref<8x1xf32, #tpu.memory_space<vmem>>, vector<8x1xf32>,
    } else {
    }
    %c0 = arith.constant 0 : index
    %c0_1 = arith.constant 0 : index
    %3 = vector.load %arg1[%c0, %c0_1] : memref<8x512xf32, #tpu.memory_space<vmem>>, vector<8x512xf32>
    %c0_2 = arith.constant 0 : index
    %c0_3 = arith.constant 0 : index
    %4 = vector.load %arg2[%c0_2, %c0_3] : memref<8x8xf32, #tpu.memory_space<vmem>>, vector<8x8xf32>
    %cst = arith.constant dense<0.000000e+00> : vector<8x8xf32>
    %5 = tpu.matmul %3, %3, %cst {dimension_numbers = #tpu.dot_dimension_numbers<[1], [1], [0], [0], [0, 0, 1, 0], [], []>} : vector<8x512xf32>, vector<8x512xf32>, vector<8x8xf32> -> vector<8x8xf32>
    %6 = arith.addf %4, %5 : vector<8x8xf32>
    %c0_4 = arith.constant 0 : index
    %c0_5 = arith.constant 0 : index
    %7 = vector.load %arg2[%c0_4, %c0_5] : memref<8x8xf32, #tpu.memory_space<vmem>>, vector<8x8xf32>
    tpu.vector_store %arg2[%c0_4, %c0_5], %6 {strides = array<i32>} : memref<8x8xf32, #tpu.memory_space<vmem>>, vector<8x8xf32>,
    %c0_6 = arith.constant 0 : index
    %c0_7 = arith.constant 0 : index
    %8 = vector.load %arg3[%c0_6, %c0_7] : memref<8x1xf32, #tpu.memory_space<vmem>>, vector<8x1xf32>
    %cst_8 = arith.constant dense<0.000000e+00> : vector<8xf32>
    %9 = vector.multi_reduction <add>, %3, %cst_8 [1] : vector<8x512xf32> to vector<8xf32>
    %10 = vector.shape_cast %9 : vector<8xf32> to vector<8x1xf32>
    %11 = arith.addf %8, %10 : vector<8x1xf32>
    %c0_9 = arith.constant 0 : index
    %c0_10 = arith.constant 0 : index
    %12 = vector.load %arg3[%c0_9, %c0_10] : memref<8x1xf32, #tpu.memory_space<vmem>>, vector<8x1xf32>
    tpu.vector_store %arg3[%c0_9, %c0_10], %11 {strides = array<i32>} : memref<8x1xf32, #tpu.memory_space<vmem>>, vector<8x1xf32>,
    %c0_i32_11 = arith.constant 0 : i32
    %13 = arith.cmpi eq, %arg0, %c0_i32_11 : i32
    %14 = arith.extui %13 : i1 to i32
    %c0_i32_12 = arith.constant 0 : i32
    %15 = arith.cmpi ne, %14, %c0_i32_12 : i32
    scf.if %15 {
      %c0_13 = arith.constant 0 : index
      %c0_14 = arith.constant 0 : index
      %16 = vector.load %arg3[%c0_13, %c0_14] : memref<8x1xf32, #tpu.memory_space<vmem>>, vector<8x1xf32>
      %cst_15 = arith.constant dense<0.000000e+00> : vector<8x8xf32>
      %17 = tpu.matmul %16, %16, %cst_15 {dimension_numbers = #tpu.dot_dimension_numbers<[1], [1], [0], [0], [0, 0, 1, 0], [], []>} : vector<8x1xf32>, vector<8x1xf32>, vector<8x8xf32> -> vector<8x8xf32>
      %c0_16 = arith.constant 0 : index
      %c0_17 = arith.constant 0 : index
      %18 = vector.load %arg2[%c0_16, %c0_17] : memref<8x8xf32, #tpu.memory_space<vmem>>, vector<8x8xf32>
      %cst_18 = arith.constant 5.120000e+02 : f32
      %19 = vector.broadcast %cst_18 : f32 to vector<8x8xf32>
      %20 = arith.divf %17, %19 : vector<8x8xf32>
      %21 = arith.subf %18, %20 : vector<8x8xf32>
      %cst_19 = arith.constant 5.120000e+02 : f32
      %cst_20 = arith.constant 1.000000e+00 : f32
      %22 = arith.subf %cst_19, %cst_20 : f32
      %23 = vector.broadcast %22 : f32 to vector<8x8xf32>
      %24 = arith.divf %21, %23 : vector<8x8xf32>
      %c0_21 = arith.constant 0 : index
      %c0_22 = arith.constant 0 : index
      %25 = vector.load %arg2[%c0_21, %c0_22] : memref<8x8xf32, #tpu.memory_space<vmem>>, vector<8x8xf32>
      tpu.vector_store %arg2[%c0_21, %c0_22], %24 {strides = array<i32>} : memref<8x8xf32, #tpu.memory_space<vmem>>, vector<8x8xf32>,
    } else {
    }
    return
  }
  func.func @transform_0(%arg0: i32) -> (i32, i32) {
    %c0_i32 = arith.constant 0 : i32
    %c0_i32_0 = arith.constant 0 : i32
    return %c0_i32, %arg0 : i32, i32
  }
  func.func @transform_1(%arg0: i32) -> (i32, i32) {
    %c0_i32 = arith.constant 0 : i32
    %c0_i32_0 = arith.constant 0 : i32
    %c0_i32_1 = arith.constant 0 : i32
    return %c0_i32, %c0_i32_0 : i32, i32
  }
}

</mosaic_0001>

<llo_original>
// kernel: cov_wrapper_forward.2
$region0: #{cov_wrapper_forward.2}
  #allocation0 [shape = 'u32[]', space=smem, size = 0x4, offset = 0x4, fixed_abs, tag = 'smem constant byte address 0x4 - core index']
  #allocation1 [shape = 'u32[144,128]{1,0:T(1,128)}', space=vmem, size = 0x12000, scoped, tag = 'internal scratch']
  #allocation2 [shape = 'f32[8,1]{1,0:T(8,128)}', space=vmem, size = 0x1000, scoped, tag = 'scratch operand']
  %s0 = inlined_call_operand.vmem [shape: f32[8,512], index: 0, kind: input, shape index: {}]
  %s1 = inlined_call_operand.hbm [shape: f32[8,8], index: 1, kind: output, shape index: {}]
  %s2 = sld [smem:[#allocation0]]
  $region22: #{cov_wrapper_forward.2} parent=0
    _
  %s4 = ssub.s32 1, %s2
  %s5 = scalar_select 0, %s4, %s2
  $region1: #{cov_wrapper_forward.2} parent=0
    #allocation3 [shape = 'u8[4096]{0}', space=vmem, size = 0x1000, scoped, tag = 'output window, operand 0, single buffered']
    #allocation4 [shape = 's32[1]{0}', space=sflag, size = 0x4, scoped, tag = 'scoped memory for cov_wrapper_forward.2']
    %6 = vsyncpa [#allocation4], 0
    // Predicated region
    $region2: #{cov_wrapper_forward.2} parent=1 // pred_check
      _
    $region3: #{cov_wrapper_forward.2} parent=1 // pred_check_branch
      %8 = sbr.rel (0) target = $region5
    $region4: #{cov_wrapper_forward.2} parent=1 // pred_region
      _
    $region5: #{cov_wrapper_forward.2} parent=1 // pred_fallthru
      _
    %p9 = scmp.eq.s32.totalorder 0, 0
    // Predicated region
    $region6: #{cov_wrapper_forward.2} parent=1 // pred_check
      %p10 = pneg %p9
    $region7: #{cov_wrapper_forward.2} parent=1 // pred_check_branch
      %12 = sbr.rel (%p10) target = $region9
    $region8: #{cov_wrapper_forward.2} parent=1 // pred_region
      %vm13 = vcmask 64512
      %14 = vst.msk [vmem:[#allocation3] sm:$0xff] %vm13, 0.0
      %vm15 = vcmask 7168
      %16 = vst.msk [vmem:[#allocation2] sm:$0xff] %vm15, 0.0
    $region9: #{cov_wrapper_forward.2} parent=1 // pred_fallthru
      _
    %v17 = vld [vmem:[%s0] sm:$0xff]
    %v18 = vld [vmem:[%s0 + $0x8] sm:$0xff]
    %v19 = vld [vmem:[%s0 + $0x10] sm:$0xff]
    %v20 = vld [vmem:[%s0 + $0x18] sm:$0xff]
    %v21 = vld [vmem:[#allocation3] sm:$0xff]
    %22 = vmatprep.subr.mxu0 %v18
    %23 = vmatpush1.xpose.msra.mxu0 %v17
    %24 = vmatprep.subr.mxu0 0.0
    %25 = vmatpush1.xpose.msra.mxu0 0.0
    %26 = vmatprep.subr.mxu0 0.0
    %27 = vmatpush1.xpose.msra.mxu0 0.0
    %28 = vmatprep.subr.mxu0 0.0
    %29 = vmatpush1.xpose.msra.mxu0 0.0
    %30 = vmatprep.subr.mxu0 0.0
    %31 = vmatpush1.xpose.msra.mxu0 0.0
    %32 = vmatprep.subr.mxu0 0.0
    %33 = vmatpush1.xpose.msra.mxu0 0.0
    %34 = vmatprep.subr.mxu0 0.0
    %35 = vmatpush1.xpose.msra.mxu0 0.0
    %36 = vmatprep.subr.mxu0 0.0
    %37 = vmatpush1.xpose.msra.mxu0 0.0
    %38 = vmatprep.subr.mxu0 0.0
    %39 = vmatpush1.xpose.msra.mxu0 0.0
    %40 = vmatprep.subr.mxu0 0.0
    %41 = vmatpush1.xpose.msra.mxu0 0.0
    %42 = vmatprep.subr.mxu0 0.0
    %43 = vmatpush1.xpose.msra.mxu0 0.0
    %44 = vmatprep.subr.mxu0 0.0
    %45 = vmatpush1.xpose.msra.mxu0 0.0
    %46 = vmatprep.subr.mxu0 0.0
    %47 = vmatpush1.xpose.msra.mxu0 0.0
    %48 = vmatprep.subr.mxu0 0.0
    %49 = vmatpush1.xpose.msra.mxu0 0.0
    %50 = vmatprep.subr.mxu0 0.0
    %51 = vmatpush1.xpose.msra.mxu0 0.0
    %52 = vmatprep.subr.mxu0 0.0
    %53 = vmatpush1.xpose.msra.mxu0 0.0
    %54 = vmatprep.subr.mxu0 0.0
    %55 = vmatpush1.xpose.msra.mxu0 0.0
    %56 = vmatprep.subr.mxu0 0.0
    %57 = vmatpush1.xpose.msra.mxu0 0.0
    %58 = vmatprep.subr.mxu0 0.0
    %59 = vmatpush1.xpose.msra.mxu0 0.0
    %60 = vmatprep.subr.mxu0 0.0
    %61 = vmatpush1.xpose.msra.mxu0 0.0
    %62 = vmatprep.subr.mxu0 0.0
    %63 = vmatpush1.xpose.msra.mxu0 0.0
    %64 = vmatprep.subr.mxu0 0.0
    %65 = vmatpush1.xpose.msra.mxu0 0.0
    %66 = vmatprep.subr.mxu0 0.0
    %67 = vmatpush1.xpose.msra.mxu0 0.0
    %68 = vmatprep.subr.mxu0 0.0
    %69 = vmatpush1.xpose.msra.mxu0 0.0
    %70 = vmatprep.subr.mxu0 0.0
    %71 = vmatpush1.xpose.msra.mxu0 0.0
    %72 = vmatprep.subr.mxu0 0.0
    %73 = vmatpush1.xpose.msra.mxu0 0.0
    %74 = vmatprep.subr.mxu0 0.0
    %75 = vmatpush1.xpose.msra.mxu0 0.0
    %76 = vmatprep.subr.mxu0 0.0
    %77 = vmatpush1.xpose.msra.mxu0 0.0
    %78 = vmatprep.subr.mxu0 0.0
    %79 = vmatpush1.xpose.msra.mxu0 0.0
    %80 = vmatprep.subr.mxu0 0.0
    %81 = vmatpush1.xpose.msra.mxu0 0.0
    %82 = vmatprep.subr.mxu0 0.0
    %83 = vmatpush1.xpose.msra.mxu0 0.0
    %84 = vmatprep.subr.mxu0 0.0
    %85 = vmatpush1.xpose.msra.mxu0 0.0
    %86 = vmatprep.mubr.f32.mxu0 %v18
    %87 = vmatmul.mubr.f32.gmra.mrb[0].mxu0 %v17
    %v88 = vpop.f32.mrb[0].mxu0
    %v89 = vadd.f32 0.0, %v88
    %v90 = vpop.f32.mrb[0].mxu0
    %91 = vdwg.mxu0
    %92 = vmatprep.subr.mxu0 %v20
    %93 = vmatpush1.xpose.msra.mxu0 %v19
    %94 = vmatprep.subr.mxu0 0.0
    %95 = vmatpush1.xpose.msra.mxu0 0.0
    %96 = vmatprep.subr.mxu0 0.0
    %97 = vmatpush1.xpose.msra.mxu0 0.0
    %98 = vmatprep.subr.mxu0 0.0
    %99 = vmatpush1.xpose.msra.mxu0 0.0
    %100 = vmatprep.subr.mxu0 0.0
    %101 = vmatpush1.xpose.msra.mxu0 0.0
    %102 = vmatprep.subr.mxu0 0.0
    %103 = vmatpush1.xpose.msra.mxu0 0.0
    %104 = vmatprep.subr.mxu0 0.0
    %105 = vmatpush1.xpose.msra.mxu0 0.0
    %106 = vmatprep.subr.mxu0 0.0
    %107 = vmatpush1.xpose.msra.mxu0 0.0
    %108 = vmatprep.subr.mxu0 0.0
    %109 = vmatpush1.xpose.msra.mxu0 0.0
    %110 = vmatprep.subr.mxu0 0.0
    %111 = vmatpush1.xpose.msra.mxu0 0.0
    %112 = vmatprep.subr.mxu0 0.0
    %113 = vmatpush1.xpose.msra.mxu0 0.0
    %114 = vmatprep.subr.mxu0 0.0
    %115 = vmatpush1.xpose.msra.mxu0 0.0
    %116 = vmatprep.subr.mxu0 0.0
    %117 = vmatpush1.xpose.msra.mxu0 0.0
    %118 = vmatprep.subr.mxu0 0.0
    %119 = vmatpush1.xpose.msra.mxu0 0.0
    %120 = vmatprep.subr.mxu0 0.0
    %121 = vmatpush1.xpose.msra.mxu0 0.0
    %122 = vmatprep.subr.mxu0 0.0
    %123 = vmatpush1.xpose.msra.mxu0 0.0
    %124 = vmatprep.subr.mxu0 0.0
    %125 = vmatpush1.xpose.msra.mxu0 0.0
    %126 = vmatprep.subr.mxu0 0.0
    %127 = vmatpush1.xpose.msra.mxu0 0.0
    %128 = vmatprep.subr.mxu0 0.0
    %129 = vmatpush1.xpose.msra.mxu0 0.0
    %130 = vmatprep.subr.mxu0 0.0
    %131 = vmatpush1.xpose.msra.mxu0 0.0
    %132 = vmatprep.subr.mxu0 0.0
    %133 = vmatpush1.xpose.msra.mxu0 0.0
    %134 = vmatprep.subr.mxu0 0.0
    %135 = vmatpush1.xpose.msra.mxu0 0.0
    %136 = vmatprep.subr.mxu0 0.0
    %137 = vmatpush1.xpose.msra.mxu0 0.0
    %138 = vmatprep.subr.mxu0 0.0
    %139 = vmatpush1.xpose.msra.mxu0 0.0
    %140 = vmatprep.subr.mxu0 0.0
    %141 = vmatpush1.xpose.msra.mxu0 0.0
    %142 = vmatprep.subr.mxu0 0.0
    %143 = vmatpush1.xpose.msra.mxu0 0.0
    %144 = vmatprep.subr.mxu0 0.0
    %145 = vmatpush1.xpose.msra.mxu0 0.0
    %146 = vmatprep.subr.mxu0 0.0
    %147 = vmatpush1.xpose.msra.mxu0 0.0
    %148 = vmatprep.subr.mxu0 0.0
    %149 = vmatpush1.xpose.msra.mxu0 0.0
    %150 = vmatprep.subr.mxu0 0.0
    %151 = vmatpush1.xpose.msra.mxu0 0.0
    %152 = vmatprep.subr.mxu0 0.0
    %153 = vmatpush1.xpose.msra.mxu0 0.0
    %154 = vmatprep.subr.mxu0 0.0
    %155 = vmatpush1.xpose.msra.mxu0 0.0
    %156 = vmatprep.mubr.f32.mxu0 %v20
    %157 = vmatmul.mubr.f32.gmra.mrb[0].mxu0 %v19
    %v158 = vpop.f32.mrb[0].mxu0
    %v159 = vadd.f32 %v89, %v158
    %v160 = vpop.f32.mrb[0].mxu0
    %161 = vdwg.mxu0
    %v162 = vadd.f32 %v21, %v159
    %vm163 = vcmask 64512
    %164 = vst.msk [vmem:[#allocation3] sm:$0xff] %vm163, %v162
    %v165 = vld [vmem:[#allocation2] sm:$0xff]
    %v166 = vadd.f32 %v17, %v18
    %v167 = vadd.f32 %v166, %v19
    %v168 = vadd.f32 %v167, %v20
    %169 = vadd.xlane.f32.xlu0 %v168
    %v170 = vpop.xlane.xlu0 %169
    %v171 = vadd.f32 %v165, %v170
    %vm172 = vcmask 7168
    %173 = vst.msk [vmem:[#allocation2] sm:$0xff] %vm172, %v171
    // Predicated region
    $region10: #{cov_wrapper_forward.2} parent=1 // pred_check
      %p174 = pneg %p9
    $region11: #{cov_wrapper_forward.2} parent=1 // pred_check_branch
      %176 = sbr.rel (%p174) target = $region13
    $region12: #{cov_wrapper_forward.2} parent=1 // pred_region
      %v177 = vld [vmem:[#allocation2] sm:$0xff]
      %v179 = vsel %vm172, %v177, 0
      %181 = vmatprep.subr.mxu0 0.0
      %182 = vmatpush1.xpose.msra.mxu0 %v179
      %183 = vmatprep.subr.mxu0 0.0
      %184 = vmatpush1.xpose.msra.mxu0 0.0
      %185 = vmatprep.subr.mxu0 0.0
      %186 = vmatpush1.xpose.msra.mxu0 0.0
      %187 = vmatprep.subr.mxu0 0.0
      %188 = vmatpush1.xpose.msra.mxu0 0.0
      %189 = vmatprep.subr.mxu0 0.0
      %190 = vmatpush1.xpose.msra.mxu0 0.0
      %191 = vmatprep.subr.mxu0 0.0
      %192 = vmatpush1.xpose.msra.mxu0 0.0
      %193 = vmatprep.subr.mxu0 0.0
      %194 = vmatpush1.xpose.msra.mxu0 0.0
      %195 = vmatprep.subr.mxu0 0.0
      %196 = vmatpush1.xpose.msra.mxu0 0.0
      %197 = vmatprep.subr.mxu0 0.0
      %198 = vmatpush1.xpose.msra.mxu0 0.0
      %199 = vmatprep.subr.mxu0 0.0
      %200 = vmatpush1.xpose.msra.mxu0 0.0
      %201 = vmatprep.subr.mxu0 0.0
      %202 = vmatpush1.xpose.msra.mxu0 0.0
      %203 = vmatprep.subr.mxu0 0.0
      %204 = vmatpush1.xpose.msra.mxu0 0.0
      %205 = vmatprep.subr.mxu0 0.0
      %206 = vmatpush1.xpose.msra.mxu0 0.0
      %207 = vmatprep.subr.mxu0 0.0
      %208 = vmatpush1.xpose.msra.mxu0 0.0
      %209 = vmatprep.subr.mxu0 0.0
      %210 = vmatpush1.xpose.msra.mxu0 0.0
      %211 = vmatprep.subr.mxu0 0.0
      %212 = vmatpush1.xpose.msra.mxu0 0.0
      %213 = vmatprep.subr.mxu0 0.0
      %214 = vmatpush1.xpose.msra.mxu0 0.0
      %215 = vmatprep.subr.mxu0 0.0
      %216 = vmatpush1.xpose.msra.mxu0 0.0
      %217 = vmatprep.subr.mxu0 0.0
      %218 = vmatpush1.xpose.msra.mxu0 0.0
      %219 = vmatprep.subr.mxu0 0.0
      %220 = vmatpush1.xpose.msra.mxu0 0.0
      %221 = vmatprep.subr.mxu0 0.0
      %222 = vmatpush1.xpose.msra.mxu0 0.0
      %223 = vmatprep.subr.mxu0 0.0
      %224 = vmatpush1.xpose.msra.mxu0 0.0
      %225 = vmatprep.subr.mxu0 0.0
      %226 = vmatpush1.xpose.msra.mxu0 0.0
      %227 = vmatprep.subr.mxu0 0.0
      %228 = vmatpush1.xpose.msra.mxu0 0.0
      %229 = vmatprep.subr.mxu0 0.0
      %230 = vmatpush1.xpose.msra.mxu0 0.0
      %231 = vmatprep.subr.mxu0 0.0
      %232 = vmatpush1.xpose.msra.mxu0 0.0
      %233 = vmatprep.subr.mxu0 0.0
      %234 = vmatpush1.xpose.msra.mxu0 0.0
      %235 = vmatprep.subr.mxu0 0.0
      %236 = vmatpush1.xpose.msra.mxu0 0.0
      %237 = vmatprep.subr.mxu0 0.0
      %238 = vmatpush1.xpose.msra.mxu0 0.0
      %239 = vmatprep.subr.mxu0 0.0
      %240 = vmatpush1.xpose.msra.mxu0 0.0
      %241 = vmatprep.subr.mxu0 0.0
      %242 = vmatpush1.xpose.msra.mxu0 0.0
      %243 = vmatprep.subr.mxu0 0.0
      %244 = vmatpush1.xpose.msra.mxu0 0.0
      %245 = vmatprep.mubr.f32.mxu0 0.0
      %246 = vmatmul.mubr.f32.gmra.mrb[0].mxu0 %v179
      %v247 = vpop.f32.mrb[0].mxu0
      %v248 = vadd.f32 0.0, %v247
      %v249 = vpop.f32.mrb[0].mxu0
      %250 = vdwg.mxu0
      %v251 = vld [vmem:[#allocation3] sm:$0xff]
      %v252 = vrcp.pop 512.0
      %v253 = vmul.f32 %v248, %v252
      %v254 = vsub.f32 %v251, %v253
      %v255 = vrcp.pop 511.0
      %v256 = vmul.f32 %v254, %v255
      %257 = vst.msk [vmem:[#allocation3] sm:$0xff] %vm163, %v256
    $region13: #{cov_wrapper_forward.2} parent=1 // pred_fallthru
      _
    // Predicated region
    $region14: #{cov_wrapper_forward.2} parent=1 // pred_check
      _
    $region15: #{cov_wrapper_forward.2} parent=1 // pred_check_branch
      %259 = sbr.rel (0) target = $region17
    $region16: #{cov_wrapper_forward.2} parent=1 // pred_region
      %s261 = ssub.s32 128, 128
      %262 = vsyncadd [#allocation4], %s261
      %s264 = sshll.u32 [#allocation3], 4
      %s265 = int_to_ptr.vmem [resolvable:$true] %s264
      %267 = dma.vmem_to_hbm [thread:$0]  %s265, 128, %s1, [#allocation4]
    $region17: #{cov_wrapper_forward.2} parent=1 // pred_fallthru
      _
    // Predicated region
    $region18: #{cov_wrapper_forward.2} parent=1 // pred_check
      _
    $region19: #{cov_wrapper_forward.2} parent=1 // pred_check_branch
      %269 = sbr.rel (0) target = $region21
    $region20: #{cov_wrapper_forward.2} parent=1 // pred_region
      %270 = dma.done [#allocation4], 128
    $region21: #{cov_wrapper_forward.2} parent=1 // pred_fallthru
      _
    %271 = vsyncpa [#allocation4], 1

// kernel: cov_wrapper_forward.3
$region0: #{cov_wrapper_forward.3}
  #allocation0 [shape = 'u32[]', space=smem, size = 0x4, offset = 0x4, fixed_abs, tag = 'smem constant byte address 0x4 - core index']
  #allocation1 [shape = 'u32[144,128]{1,0:T(1,128)}', space=vmem, size = 0x12000, scoped, tag = 'internal scratch']
  #allocation2 [shape = 'f32[8,256]{1,0:T(8,128)}', space=vmem, size = 0x2000, scoped, tag = 'scratch operand']
  %s0 = inlined_call_operand.vmem [shape: bf16[8,512], index: 0, kind: input, shape index: {}]
  %s1 = inlined_call_operand.vmem [shape: bf16[512,512], index: 1, kind: input, shape index: {}]
  %s2 = inlined_call_operand.vmem [shape: f32[1,512], index: 2, kind: input, shape index: {}]
  %s3 = inlined_call_operand.hbm [shape: f32[8,512], index: 3, kind: output, shape index: {}]
  %s4 = sld [smem:[#allocation0]]
  $region53: #{cov_wrapper_forward.3} parent=0
    _
  %s6 = ssub.s32 1, %s4
  %s7 = scalar_select 0, %s6, %s4
  $region1: #{cov_wrapper_forward.3} parent=0
    #allocation3 [shape = 'u8[16384]{0}', space=vmem, size = 0x4000, scoped, tag = 'output window, operand 0']
    #allocation4 [shape = 's32[2]{0}', space=sflag, size = 0x8, scoped, tag = 'scoped memory for cov_wrapper_forward.3']
    %8 = vsyncpa [#allocation4], 0
    %s9 = scalar_lea.sflag [#allocation4], 1
    %10 = vsyncpa %s9, 0
    loop: start=0, step=1, limit=4
    $region2: #{cov_wrapper_forward.3} parent=1 // loop_pre_header
      _
    $region3: #{cov_wrapper_forward.3} parent=1 // loop_header
      %s12 = sphi 0, %s16
      %p13 = scmp.ge.s32.totalorder %s12, 4
      %s19 = sphi 0, %s31
      %s20 = sphi 0, %s27
      %s21 = sphi 0, %s19
      %s22 = sphi 0, %s20
      %s23 = sphi 0, %s21
      %s24 = sphi 0, %s22
      %s34 = sphi 0, %s36
      %s37 = sphi 0, %s34
      %s38 = sphi 0, %s37
      %s54 = sphi 0, %s38
      %s62 = sphi 0, %s64
      %s65 = sphi 0, %s62
      %s66 = sphi 0, %s65
      %s82 = sphi 0, %s66
      %s88 = sphi 0, %s90
      %s91 = sphi 0, %s88
      %s92 = sphi 0, %s91
      %s108 = sphi 0, %s92
      %s114 = sphi 0, %s116
      %s117 = sphi 0, %s114
      %s118 = sphi 0, %s117
      %s134 = sphi 0, %s118
    $region4: #{cov_wrapper_forward.3} parent=1 // loop_header_branch
      %15 = sbr.rel (%p13) target = $region8
    $region5: #{cov_wrapper_forward.3} parent=1 // loop_body
      %s17 = ssub.s32 %s12, 1
      %s18 = ssub.s32 %s12, 2
      %s25 = sadd.s32 1, %s20
      %p26 = scmp.ge.s32.totalorder %s25, 1
      %s27 = scalar_select %p26, 0, %s25
      %s28 = sadd.s32 1, %s19
      %s29 = scalar_select %p26, %s28, %s19
      %p30 = scmp.ge.s32.totalorder %s29, 2
      %s31 = scalar_select %p30, 0, %s29
      %s32 = ssub.s32 %s20, %s27
      %p33 = scmp.eq.s32.totalorder %s32, 0
      %s35 = sadd.s32 %s34, 1
      %s36 = scalar_select %p33, %s34, %s35
      %p39 = pneg %p33
      %p40 = scmp.eq.s32.totalorder %s12, 1
      %p41 = por %p39, %p40
      %p42 = scmp.ne.s32.totalorder %s34, %s37
      %p43 = scmp.eq.s32.totalorder %s12, 0
      %p44 = por %p42, %p43
      %p45 = scmp.ne.s32.totalorder %s34, %s37
      %p46 = scmp.eq.s32.totalorder %s17, 1
      %p47 = por %p45, %p46
      %p48 = scmp.ne.s32.totalorder %s37, %s38
      %p49 = scmp.eq.s32.totalorder %s17, 0
      %p50 = por %p48, %p49
      %p51 = scmp.ne.s32.totalorder %s37, %s38
      %p52 = scmp.eq.s32.totalorder %s18, 1
      %p53 = por %p51, %p52
      %p55 = scmp.ne.s32.totalorder %s38, %s54
      %p56 = scmp.eq.s32.totalorder %s18, 0
      %p57 = por %p55, %p56
      %s58 = ssub.s32 %s19, %s31
      %s59 = ssub.s32 %s20, %s27
      %s60 = sor.u32 %s58, %s59
      %p61 = scmp.eq.s32.totalorder %s60, 0
      %s63 = sadd.s32 %s62, 1
      %s64 = scalar_select %p61, %s62, %s63
      %p67 = pneg %p61
      %p68 = scmp.eq.s32.totalorder %s12, 1
      %p69 = por %p67, %p68
      %p70 = scmp.ne.s32.totalorder %s62, %s65
      %p71 = scmp.eq.s32.totalorder %s12, 0
      %p72 = por %p70, %p71
      %p73 = scmp.ne.s32.totalorder %s62, %s65
      %p74 = scmp.eq.s32.totalorder %s17, 1
      %p75 = por %p73, %p74
      %p76 = scmp.ne.s32.totalorder %s65, %s66
      %p77 = scmp.eq.s32.totalorder %s17, 0
      %p78 = por %p76, %p77
      %p79 = scmp.ne.s32.totalorder %s65, %s66
      %p80 = scmp.eq.s32.totalorder %s18, 1
      %p81 = por %p79, %p80
      %p83 = scmp.ne.s32.totalorder %s66, %s82
      %p84 = scmp.eq.s32.totalorder %s18, 0
      %p85 = por %p83, %p84
      %s86 = ssub.s32 %s19, %s31
      %p87 = scmp.eq.s32.totalorder %s86, 0
      %s89 = sadd.s32 %s88, 1
      %s90 = scalar_select %p87, %s88, %s89
      %p93 = pneg %p87
      %p94 = scmp.eq.s32.totalorder %s12, 1
      %p95 = por %p93, %p94
      %p96 = scmp.ne.s32.totalorder %s88, %s91
      %p97 = scmp.eq.s32.totalorder %s12, 0
      %p98 = por %p96, %p97
      %p99 = scmp.ne.s32.totalorder %s88, %s91
      %p100 = scmp.eq.s32.totalorder %s17, 1
      %p101 = por %p99, %p100
      %p102 = scmp.ne.s32.totalorder %s91, %s92
      %p103 = scmp.eq.s32.totalorder %s17, 0
      %p104 = por %p102, %p103
      %p105 = scmp.ne.s32.totalorder %s91, %s92
      %p106 = scmp.eq.s32.totalorder %s18, 1
      %p107 = por %p105, %p106
      %p109 = scmp.ne.s32.totalorder %s92, %s108
      %p110 = scmp.eq.s32.totalorder %s18, 0
      %p111 = por %p109, %p110
      %s112 = ssub.s32 %s19, %s31
      %p113 = scmp.eq.s32.totalorder %s112, 0
      %s115 = sadd.s32 %s114, 1
      %s116 = scalar_select %p113, %s114, %s115
      %p119 = pneg %p113
      %p120 = scmp.eq.s32.totalorder %s12, 1
      %p121 = por %p119, %p120
      %p122 = scmp.ne.s32.totalorder %s114, %s117
      %p123 = scmp.eq.s32.totalorder %s12, 0
      %p124 = por %p122, %p123
      %p125 = scmp.ne.s32.totalorder %s114, %s117
      %p126 = scmp.eq.s32.totalorder %s17, 1
      %p127 = por %p125, %p126
      %p128 = scmp.ne.s32.totalorder %s117, %s118
      %p129 = scmp.eq.s32.totalorder %s17, 0
      %p130 = por %p128, %p129
      %p131 = scmp.ne.s32.totalorder %s117, %s118
      %p132 = scmp.eq.s32.totalorder %s18, 1
      %p133 = por %p131, %p132
      %p135 = scmp.ne.s32.totalorder %s118, %s134
      %p136 = scmp.eq.s32.totalorder %s18, 0
      %p137 = por %p135, %p136
      %p138 = scmp.le.s32.totalorder 1, %s12
      %p139 = scmp.lt.s32.totalorder %s12, 3
      %p140 = pnand %p138, %p139
      %p141 = pneg %p140
      // Predicated region
      $region9: #{cov_wrapper_forward.3} parent=5 // pred_check
        _
      $region10: #{cov_wrapper_forward.3} parent=5 // pred_check_branch
        %143 = sbr.rel (%p140) target = $region12
      $region11: #{cov_wrapper_forward.3} parent=5 // pred_region
        %s144 = ssub.s32 %s12, 1
        // Predicated region
        $region13: #{cov_wrapper_forward.3} parent=11 // pred_check
          %p145 = pneg %p50
        $region14: #{cov_wrapper_forward.3} parent=11 // pred_check_branch
          %147 = sbr.rel (%p145) target = $region16
        $region15: #{cov_wrapper_forward.3} parent=11 // pred_region
          %s148 = smul.u32 4, %s22
          %p149 = scmp.lt.s32.totalorder %s148, 3
          %s150 = scalar_select %p149, %s148, 3
          %s151 = smul.addr %s150, 4
          %s152 = scalar_lea.vmem %s0, %s151
          %s153 = smul.u32 4, %s22
        $region16: #{cov_wrapper_forward.3} parent=11 // pred_fallthru
          _
      $region12: #{cov_wrapper_forward.3} parent=5 // pred_fallthru
        _
      %p154 = scmp.lt.s32.totalorder %s12, 2
      // Predicated region
      $region17: #{cov_wrapper_forward.3} parent=5 // pred_check
        %p155 = pneg %p154
      $region18: #{cov_wrapper_forward.3} parent=5 // pred_check_branch
        %157 = sbr.rel (%p155) target = $region20
      $region19: #{cov_wrapper_forward.3} parent=5 // pred_region
        // Predicated region
        $region21: #{cov_wrapper_forward.3} parent=19 // pred_check
          %p158 = pneg %p72
        $region22: #{cov_wrapper_forward.3} parent=19 // pred_check_branch
          %160 = sbr.rel (%p158) target = $region24
        $region23: #{cov_wrapper_forward.3} parent=19 // pred_region
          %s161 = smul.u32 32, %s19
          %s162 = smul.u32 4, %s20
          %p163 = scmp.lt.s32.totalorder %s161, 63
          %s164 = scalar_select %p163, %s161, 63
          %p165 = scmp.lt.s32.totalorder %s162, 3
          %s166 = scalar_select %p165, %s162, 3
          %s167 = smul.addr %s164, 4
          %s168 = sadd.s32 %s166, %s167
          %s169 = smul.addr %s168, 4
          %s170 = scalar_lea.vmem %s1, %s169
          %s171 = smul.u32 32, %s19
          %s172 = smul.u32 4, %s20
        $region24: #{cov_wrapper_forward.3} parent=19 // pred_fallthru
          _
        // Predicated region
        $region25: #{cov_wrapper_forward.3} parent=19 // pred_check
          %p173 = pneg %p98
        $region26: #{cov_wrapper_forward.3} parent=19 // pred_check_branch
          %175 = sbr.rel (%p173) target = $region28
        $region27: #{cov_wrapper_forward.3} parent=19 // pred_region
          %s176 = smul.u32 2, %s19
          %p177 = scmp.lt.s32.totalorder %s176, 3
          %s178 = scalar_select %p177, %s176, 3
          %s179 = scalar_lea.vmem %s2, %s178
          %s180 = smul.u32 2, %s19
        $region28: #{cov_wrapper_forward.3} parent=19 // pred_fallthru
          _
      $region20: #{cov_wrapper_forward.3} parent=5 // pred_fallthru
        _
      %p181 = scmp.le.s32.totalorder 1, %s12
      %p182 = scmp.lt.s32.totalorder %s12, 3
      %p183 = pnand %p181, %p182
      %p184 = pneg %p183
      // Predicated region
      $region29: #{cov_wrapper_forward.3} parent=5 // pred_check
        _
      $region30: #{cov_wrapper_forward.3} parent=5 // pred_check_branch
        %186 = sbr.rel (%p183) target = $region32
      $region31: #{cov_wrapper_forward.3} parent=5 // pred_region
        %s187 = ssub.s32 %s12, 1
        %s188 = smul.u32 4, %s22
        %p189 = scmp.lt.s32.totalorder %s188, 3
        %s190 = scalar_select %p189, %s188, 3
        %s191 = smul.addr %s190, 4
        %s192 = scalar_lea.vmem %s0, %s191
        %p193 = pneg %p50
        %p194 = pneg %p47
        %s195 = smul.u32 32, %s21
        %s196 = smul.u32 4, %s22
        %p197 = scmp.lt.s32.totalorder %s195, 63
        %s198 = scalar_select %p197, %s195, 63
        %p199 = scmp.lt.s32.totalorder %s196, 3
        %s200 = scalar_select %p199, %s196, 3
        %s201 = smul.addr %s198, 4
        %s202 = sadd.s32 %s200, %s201
        %s203 = smul.addr %s202, 4
        %s204 = scalar_lea.vmem %s1, %s203
        %p205 = pneg %p78
        %p206 = pneg %p75
        %s207 = smul.u32 2, %s21
        %p208 = scmp.lt.s32.totalorder %s207, 3
        %s209 = scalar_select %p208, %s207, 3
        %s210 = scalar_lea.vmem %s2, %s209
        %p211 = pneg %p104
        %p212 = pneg %p101
        %p213 = pneg %p130
        %p214 = pneg %p127
        %s215 = sand.u32 %s117, 1
        %s216 = scalar_lea.sflag [#allocation4], %s215
        %s217 = sand.u32 %s117, 1
        %s218 = smul.addr %s217, 16
        %s219 = scalar_lea.vmem [#allocation3], %s218
        %s220 = smul.u32 4, %s22
        %p221 = scmp.lt.s32.totalorder %s220, 3
        %s222 = scalar_select %p221, %s220, 3
        %s223 = smul.addr %s222, 4
        %s224 = scalar_lea.vmem %s0, %s223
        %s225 = smul.u32 4, %s22
        %s226 = smul.u32 32, %s21
        %s227 = smul.u32 4, %s22
        %p228 = scmp.lt.s32.totalorder %s226, 63
        %s229 = scalar_select %p228, %s226, 63
        %p230 = scmp.lt.s32.totalorder %s227, 3
        %s231 = scalar_select %p230, %s227, 3
        %s232 = smul.addr %s229, 4
        %s233 = sadd.s32 %s231, %s232
        %s234 = smul.addr %s233, 4
        %s235 = scalar_lea.vmem %s1, %s234
        %s236 = smul.u32 32, %s21
        %s237 = smul.u32 4, %s22
        %s238 = smul.u32 2, %s21
        %p239 = scmp.lt.s32.totalorder %s238, 3
        %s240 = scalar_select %p239, %s238, 3
        %s241 = scalar_lea.vmem %s2, %s240
        %s242 = smul.u32 2, %s21
        %s243 = smul.u32 2, %s21
        %p244 = scmp.eq.s32.totalorder %s22, 0
        // Predicated region
        $region33: #{cov_wrapper_forward.3} parent=31 // pred_check
          %p245 = pneg %p244
        $region34: #{cov_wrapper_forward.3} parent=31 // pred_check_branch
          %247 = sbr.rel (%p245) target = $region36
        $region35: #{cov_wrapper_forward.3} parent=31 // pred_region
          %248 = vst [vmem:[#allocation2] sm:$0xff] 0.0
          %249 = vst [vmem:[#allocation2 + $0x8] sm:$0xff] 0.0
        $region36: #{cov_wrapper_forward.3} parent=31 // pred_fallthru
          _
        %v250 = vld [vmem:[#allocation2] sm:$0xff]
        %v251 = vld [vmem:[#allocation2 + $0x8] sm:$0xff]
        %v252 = vld [vmem:[%s224] sm:$0xff]
        %v253 = vld [vmem:[%s224 + $0x8] sm:$0xff]
        %v254 = vld [vmem:[%s235] sm:$0xff]
        %v255 = vld [vmem:[%s235 + $0x8] sm:$0xff]
        %v256 = vld [vmem:[%s235 + $0x10] sm:$0xff]
        %v257 = vld [vmem:[%s235 + $0x18] sm:$0xff]
        %v258 = vld [vmem:[%s235 + $0x20] sm:$0xff]
        %v259 = vld [vmem:[%s235 + $0x28] sm:$0xff]
        %v260 = vld [vmem:[%s235 + $0x30] sm:$0xff]
        %v261 = vld [vmem:[%s235 + $0x38] sm:$0xff]
        %v262 = vld [vmem:[%s235 + $0x40] sm:$0xff]
        %v263 = vld [vmem:[%s235 + $0x48] sm:$0xff]
        %v264 = vld [vmem:[%s235 + $0x50] sm:$0xff]
        %v265 = vld [vmem:[%s235 + $0x58] sm:$0xff]
        %v266 = vld [vmem:[%s235 + $0x60] sm:$0xff]
        %v267 = vld [vmem:[%s235 + $0x68] sm:$0xff]
        %v268 = vld [vmem:[%s235 + $0x70] sm:$0xff]
        %v269 = vld [vmem:[%s235 + $0x78] sm:$0xff]
        %v270 = vld [vmem:[%s235 + $0x80] sm:$0xff]
        %v271 = vld [vmem:[%s235 + $0x88] sm:$0xff]
        %v272 = vld [vmem:[%s235 + $0x90] sm:$0xff]
        %v273 = vld [vmem:[%s235 + $0x98] sm:$0xff]
        %v274 = vld [vmem:[%s235 + $0xa0] sm:$0xff]
        %v275 = vld [vmem:[%s235 + $0xa8] sm:$0xff]
        %v276 = vld [vmem:[%s235 + $0xb0] sm:$0xff]
        %v277 = vld [vmem:[%s235 + $0xb8] sm:$0xff]
        %v278 = vld [vmem:[%s235 + $0xc0] sm:$0xff]
        %v279 = vld [vmem:[%s235 + $0xc8] sm:$0xff]
        %v280 = vld [vmem:[%s235 + $0xd0] sm:$0xff]
        %v281 = vld [vmem:[%s235 + $0xd8] sm:$0xff]
        %v282 = vld [vmem:[%s235 + $0xe0] sm:$0xff]
        %v283 = vld [vmem:[%s235 + $0xe8] sm:$0xff]
        %v284 = vld [vmem:[%s235 + $0xf0] sm:$0xff]
        %v285 = vld [vmem:[%s235 + $0xf8] sm:$0xff]
        %v286 = vld [vmem:[%s235 + $0x100] sm:$0xff]
        %v287 = vld [vmem:[%s235 + $0x108] sm:$0xff]
        %v288 = vld [vmem:[%s235 + $0x110] sm:$0xff]
        %v289 = vld [vmem:[%s235 + $0x118] sm:$0xff]
        %v290 = vld [vmem:[%s235 + $0x120] sm:$0xff]
        %v291 = vld [vmem:[%s235 + $0x128] sm:$0xff]
        %v292 = vld [vmem:[%s235 + $0x130] sm:$0xff]
        %v293 = vld [vmem:[%s235 + $0x138] sm:$0xff]
        %v294 = vld [vmem:[%s235 + $0x140] sm:$0xff]
        %v295 = vld [vmem:[%s235 + $0x148] sm:$0xff]
        %v296 = vld [vmem:[%s235 + $0x150] sm:$0xff]
        %v297 = vld [vmem:[%s235 + $0x158] sm:$0xff]
        %v298 = vld [vmem:[%s235 + $0x160] sm:$0xff]
        %v299 = vld [vmem:[%s235 + $0x168] sm:$0xff]
        %v300 = vld [vmem:[%s235 + $0x170] sm:$0xff]
        %v301 = vld [vmem:[%s235 + $0x178] sm:$0xff]
        %v302 = vld [vmem:[%s235 + $0x180] sm:$0xff]
        %v303 = vld [vmem:[%s235 + $0x188] sm:$0xff]
        %v304 = vld [vmem:[%s235 + $0x190] sm:$0xff]
        %v305 = vld [vmem:[%s235 + $0x198] sm:$0xff]
        %v306 = vld [vmem:[%s235 + $0x1a0] sm:$0xff]
        %v307 = vld [vmem:[%s235 + $0x1a8] sm:$0xff]
        %v308 = vld [vmem:[%s235 + $0x1b0] sm:$0xff]
        %v309 = vld [vmem:[%s235 + $0x1b8] sm:$0xff]
        %v310 = vld [vmem:[%s235 + $0x1c0] sm:$0xff]
        %v311 = vld [vmem:[%s235 + $0x1c8] sm:$0xff]
        %v312 = vld [vmem:[%s235 + $0x1d0] sm:$0xff]
        %v313 = vld [vmem:[%s235 + $0x1d8] sm:$0xff]
        %v314 = vld [vmem:[%s235 + $0x1e0] sm:$0xff]
        %v315 = vld [vmem:[%s235 + $0x1e8] sm:$0xff]
        %v316 = vld [vmem:[%s235 + $0x1f0] sm:$0xff]
        %v317 = vld [vmem:[%s235 + $0x1f8] sm:$0xff]
        %v320 = vunpack.c.l.b16 %v252
        %v321 = vunpack.c.h.b16 %v252
        %v322 = vunpack.c.l.b16 %v253
        %v323 = vunpack.c.h.b16 %v253
        %v324 = vpack.c.b16 %v320, %v320
        %v325 = vpack.c.b16 %v321, %v321
        %v326 = vpack.c.b16 %v322, %v322
        %v327 = vpack.c.b16 %v323, %v323
        %v396 = vunpack.c.l.b16 %v254
        %v397 = vunpack.c.h.b16 %v254
        %v398 = vunpack.c.l.b16 %v255
        %v399 = vunpack.c.h.b16 %v255
        %v400 = vunpack.c.l.b16 %v256
        %v401 = vunpack.c.h.b16 %v256
        %v402 = vunpack.c.l.b16 %v257
        %v403 = vunpack.c.h.b16 %v257
        %v404 = vunpack.c.l.b16 %v258
        %v405 = vunpack.c.h.b16 %v258
        %v406 = vunpack.c.l.b16 %v259
        %v407 = vunpack.c.h.b16 %v259
        %v408 = vunpack.c.l.b16 %v260
        %v409 = vunpack.c.h.b16 %v260
        %v410 = vunpack.c.l.b16 %v261
        %v411 = vunpack.c.h.b16 %v261
        %v412 = vunpack.c.l.b16 %v262
        %v413 = vunpack.c.h.b16 %v262
        %v414 = vunpack.c.l.b16 %v263
        %v415 = vunpack.c.h.b16 %v263
        %v416 = vunpack.c.l.b16 %v264
        %v417 = vunpack.c.h.b16 %v264
        %v418 = vunpack.c.l.b16 %v265
        %v419 = vunpack.c.h.b16 %v265
        %v420 = vunpack.c.l.b16 %v266
        %v421 = vunpack.c.h.b16 %v266
        %v422 = vunpack.c.l.b16 %v267
        %v423 = vunpack.c.h.b16 %v267
        %v424 = vunpack.c.l.b16 %v268
        %v425 = vunpack.c.h.b16 %v268
        %v426 = vunpack.c.l.b16 %v269
        %v427 = vunpack.c.h.b16 %v269
        %v428 = vunpack.c.l.b16 %v270
        %v429 = vunpack.c.h.b16 %v270
        %v430 = vunpack.c.l.b16 %v271
        %v431 = vunpack.c.h.b16 %v271
        %v432 = vunpack.c.l.b16 %v272
        %v433 = vunpack.c.h.b16 %v272
        %v434 = vunpack.c.l.b16 %v273
        %v435 = vunpack.c.h.b16 %v273
        %v436 = vunpack.c.l.b16 %v274
        %v437 = vunpack.c.h.b16 %v274
        %v438 = vunpack.c.l.b16 %v275
        %v439 = vunpack.c.h.b16 %v275
        %v440 = vunpack.c.l.b16 %v276
        %v441 = vunpack.c.h.b16 %v276
        %v442 = vunpack.c.l.b16 %v277
        %v443 = vunpack.c.h.b16 %v277
        %v444 = vunpack.c.l.b16 %v278
        %v445 = vunpack.c.h.b16 %v278
        %v446 = vunpack.c.l.b16 %v279
        %v447 = vunpack.c.h.b16 %v279
        %v448 = vunpack.c.l.b16 %v280
        %v449 = vunpack.c.h.b16 %v280
        %v450 = vunpack.c.l.b16 %v281
        %v451 = vunpack.c.h.b16 %v281
        %v452 = vunpack.c.l.b16 %v282
        %v453 = vunpack.c.h.b16 %v282
        %v454 = vunpack.c.l.b16 %v283
        %v455 = vunpack.c.h.b16 %v283
        %v456 = vunpack.c.l.b16 %v284
        %v457 = vunpack.c.h.b16 %v284
        %v458 = vunpack.c.l.b16 %v285
        %v459 = vunpack.c.h.b16 %v285
        %v460 = vunpack.c.l.b16 %v286
        %v461 = vunpack.c.h.b16 %v286
        %v462 = vunpack.c.l.b16 %v287
        %v463 = vunpack.c.h.b16 %v287
        %v464 = vunpack.c.l.b16 %v288
        %v465 = vunpack.c.h.b16 %v288
        %v466 = vunpack.c.l.b16 %v289
        %v467 = vunpack.c.h.b16 %v289
        %v468 = vunpack.c.l.b16 %v290
        %v469 = vunpack.c.h.b16 %v290
        %v470 = vunpack.c.l.b16 %v291
        %v471 = vunpack.c.h.b16 %v291
        %v472 = vunpack.c.l.b16 %v292
        %v473 = vunpack.c.h.b16 %v292
        %v474 = vunpack.c.l.b16 %v293
        %v475 = vunpack.c.h.b16 %v293
        %v476 = vunpack.c.l.b16 %v294
        %v477 = vunpack.c.h.b16 %v294
        %v478 = vunpack.c.l.b16 %v295
        %v479 = vunpack.c.h.b16 %v295
        %v480 = vunpack.c.l.b16 %v296
        %v481 = vunpack.c.h.b16 %v296
        %v482 = vunpack.c.l.b16 %v297
        %v483 = vunpack.c.h.b16 %v297
        %v484 = vunpack.c.l.b16 %v298
        %v485 = vunpack.c.h.b16 %v298
        %v486 = vunpack.c.l.b16 %v299
        %v487 = vunpack.c.h.b16 %v299
        %v488 = vunpack.c.l.b16 %v300
        %v489 = vunpack.c.h.b16 %v300
        %v490 = vunpack.c.l.b16 %v301
        %v491 = vunpack.c.h.b16 %v301
        %v492 = vunpack.c.l.b16 %v302
        %v493 = vunpack.c.h.b16 %v302
        %v494 = vunpack.c.l.b16 %v303
        %v495 = vunpack.c.h.b16 %v303
        %v496 = vunpack.c.l.b16 %v304
        %v497 = vunpack.c.h.b16 %v304
        %v498 = vunpack.c.l.b16 %v305
        %v499 = vunpack.c.h.b16 %v305
        %v500 = vunpack.c.l.b16 %v306
        %v501 = vunpack.c.h.b16 %v306
        %v502 = vunpack.c.l.b16 %v307
        %v503 = vunpack.c.h.b16 %v307
        %v504 = vunpack.c.l.b16 %v308
        %v505 = vunpack.c.h.b16 %v308
        %v506 = vunpack.c.l.b16 %v309
        %v507 = vunpack.c.h.b16 %v309
        %v508 = vunpack.c.l.b16 %v310
        %v509 = vunpack.c.h.b16 %v310
        %v510 = vunpack.c.l.b16 %v311
        %v511 = vunpack.c.h.b16 %v311
        %v512 = vunpack.c.l.b16 %v312
        %v513 = vunpack.c.h.b16 %v312
        %v514 = vunpack.c.l.b16 %v313
        %v515 = vunpack.c.h.b16 %v313
        %v516 = vunpack.c.l.b16 %v314
        %v517 = vunpack.c.h.b16 %v314
        %v518 = vunpack.c.l.b16 %v315
        %v519 = vunpack.c.h.b16 %v315
        %v520 = vunpack.c.l.b16 %v316
        %v521 = vunpack.c.h.b16 %v316
        %v522 = vunpack.c.l.b16 %v317
        %v523 = vunpack.c.h.b16 %v317
        %v524 = vpack.c.b16 %v400, %v396
        %v525 = vpack.c.b16 %v401, %v397
        %v526 = vpack.c.b16 %v402, %v398
        %v527 = vpack.c.b16 %v403, %v399
        %v528 = vpack.c.b16 %v408, %v404
        %v529 = vpack.c.b16 %v409, %v405
        %v530 = vpack.c.b16 %v410, %v406
        %v531 = vpack.c.b16 %v411, %v407
        %v532 = vpack.c.b16 %v416, %v412
        %v533 = vpack.c.b16 %v417, %v413
        %v534 = vpack.c.b16 %v418, %v414
        %v535 = vpack.c.b16 %v419, %v415
        %v536 = vpack.c.b16 %v424, %v420
        %v537 = vpack.c.b16 %v425, %v421
        %v538 = vpack.c.b16 %v426, %v422
        %v539 = vpack.c.b16 %v427, %v423
        %v540 = vpack.c.b16 %v432, %v428
        %v541 = vpack.c.b16 %v433, %v429
        %v542 = vpack.c.b16 %v434, %v430
        %v543 = vpack.c.b16 %v435, %v431
        %v544 = vpack.c.b16 %v440, %v436
        %v545 = vpack.c.b16 %v441, %v437
        %v546 = vpack.c.b16 %v442, %v438
        %v547 = vpack.c.b16 %v443, %v439
        %v548 = vpack.c.b16 %v448, %v444
        %v549 = vpack.c.b16 %v449, %v445
        %v550 = vpack.c.b16 %v450, %v446
        %v551 = vpack.c.b16 %v451, %v447
        %v552 = vpack.c.b16 %v456, %v452
        %v553 = vpack.c.b16 %v457, %v453
        %v554 = vpack.c.b16 %v458, %v454
        %v555 = vpack.c.b16 %v459, %v455
        %v556 = vpack.c.b16 %v464, %v460
        %v557 = vpack.c.b16 %v465, %v461
        %v558 = vpack.c.b16 %v466, %v462
        %v559 = vpack.c.b16 %v467, %v463
        %v560 = vpack.c.b16 %v472, %v468
        %v561 = vpack.c.b16 %v473, %v469
        %v562 = vpack.c.b16 %v474, %v470
        %v563 = vpack.c.b16 %v475, %v471
        %v564 = vpack.c.b16 %v480, %v476
        %v565 = vpack.c.b16 %v481, %v477
        %v566 = vpack.c.b16 %v482, %v478
        %v567 = vpack.c.b16 %v483, %v479
        %v568 = vpack.c.b16 %v488, %v484
        %v569 = vpack.c.b16 %v489, %v485
        %v570 = vpack.c.b16 %v490, %v486
        %v571 = vpack.c.b16 %v491, %v487
        %v572 = vpack.c.b16 %v496, %v492
        %v573 = vpack.c.b16 %v497, %v493
        %v574 = vpack.c.b16 %v498, %v494
        %v575 = vpack.c.b16 %v499, %v495
        %v576 = vpack.c.b16 %v504, %v500
        %v577 = vpack.c.b16 %v505, %v501
        %v578 = vpack.c.b16 %v506, %v502
        %v579 = vpack.c.b16 %v507, %v503
        %v580 = vpack.c.b16 %v512, %v508
        %v581 = vpack.c.b16 %v513, %v509
        %v582 = vpack.c.b16 %v514, %v510
        %v583 = vpack.c.b16 %v515, %v511
        %v584 = vpack.c.b16 %v520, %v516
        %v585 = vpack.c.b16 %v521, %v517
        %v586 = vpack.c.b16 %v522, %v518
        %v587 = vpack.c.b16 %v523, %v519
        %652 = vmatprep.subr.bf16.mxu0 %v525
        %653 = vmatpush1.bf16.xpose.msra.mxu0 %v524
        %654 = vmatprep.subr.bf16.mxu0 %v529
        %655 = vmatpush1.bf16.xpose.msra.mxu0 %v528
        %656 = vmatprep.subr.bf16.mxu0 %v533
        %657 = vmatpush1.bf16.xpose.msra.mxu0 %v532
        %658 = vmatprep.subr.bf16.mxu0 %v537
        %659 = vmatpush1.bf16.xpose.msra.mxu0 %v536
        %660 = vmatprep.subr.bf16.mxu0 %v541
        %661 = vmatpush1.bf16.xpose.msra.mxu0 %v540
        %662 = vmatprep.subr.bf16.mxu0 %v545
        %663 = vmatpush1.bf16.xpose.msra.mxu0 %v544
        %664 = vmatprep.subr.bf16.mxu0 %v549
        %665 = vmatpush1.bf16.xpose.msra.mxu0 %v548
        %666 = vmatprep.subr.bf16.mxu0 %v553
        %667 = vmatpush1.bf16.xpose.msra.mxu0 %v552
        %668 = vmatprep.subr.bf16.mxu0 %v557
        %669 = vmatpush1.bf16.xpose.msra.mxu0 %v556
        %670 = vmatprep.subr.bf16.mxu0 %v561
        %671 = vmatpush1.bf16.xpose.msra.mxu0 %v560
        %672 = vmatprep.subr.bf16.mxu0 %v565
        %673 = vmatpush1.bf16.xpose.msra.mxu0 %v564
        %674 = vmatprep.subr.bf16.mxu0 %v569
        %675 = vmatpush1.bf16.xpose.msra.mxu0 %v568
        %676 = vmatprep.subr.bf16.mxu0 %v573
        %677 = vmatpush1.bf16.xpose.msra.mxu0 %v572
        %678 = vmatprep.subr.bf16.mxu0 %v577
        %679 = vmatpush1.bf16.xpose.msra.mxu0 %v576
        %680 = vmatprep.subr.bf16.mxu0 %v581
        %681 = vmatpush1.bf16.xpose.msra.mxu0 %v580
        %682 = vmatprep.subr.bf16.mxu0 %v585
        %683 = vmatpush1.bf16.xpose.msra.mxu0 %v584
        %684 = vmatprep.mubr.bf16.mxu0 %v325
        %685 = vmatmul.mubr.bf16.gmra.mrb[0].mxu0 %v324
        %v686 = vpop.f32.mrb[0].mxu0
        %v687 = vadd.f32 0.0, %v686
        %v688 = vpop.f32.mrb[0].mxu0
        %v689 = vadd.f32 0.0, %v688
        %v690 = vpop.f32.mrb[0].mxu0
        %v691 = vpop.f32.mrb[0].mxu0
        %692 = vdwg.mxu0
        %693 = vmatprep.subr.bf16.mxu0 %v527
        %694 = vmatpush1.bf16.xpose.msra.mxu0 %v526
        %695 = vmatprep.subr.bf16.mxu0 %v531
        %696 = vmatpush1.bf16.xpose.msra.mxu0 %v530
        %697 = vmatprep.subr.bf16.mxu0 %v535
        %698 = vmatpush1.bf16.xpose.msra.mxu0 %v534
        %699 = vmatprep.subr.bf16.mxu0 %v539
        %700 = vmatpush1.bf16.xpose.msra.mxu0 %v538
        %701 = vmatprep.subr.bf16.mxu0 %v543
        %702 = vmatpush1.bf16.xpose.msra.mxu0 %v542
        %703 = vmatprep.subr.bf16.mxu0 %v547
        %704 = vmatpush1.bf16.xpose.msra.mxu0 %v546
        %705 = vmatprep.subr.bf16.mxu0 %v551
        %706 = vmatpush1.bf16.xpose.msra.mxu0 %v550
        %707 = vmatprep.subr.bf16.mxu0 %v555
        %708 = vmatpush1.bf16.xpose.msra.mxu0 %v554
        %709 = vmatprep.subr.bf16.mxu0 %v559
        %710 = vmatpush1.bf16.xpose.msra.mxu0 %v558
        %711 = vmatprep.subr.bf16.mxu0 %v563
        %712 = vmatpush1.bf16.xpose.msra.mxu0 %v562
        %713 = vmatprep.subr.bf16.mxu0 %v567
        %714 = vmatpush1.bf16.xpose.msra.mxu0 %v566
        %715 = vmatprep.subr.bf16.mxu0 %v571
        %716 = vmatpush1.bf16.xpose.msra.mxu0 %v570
        %717 = vmatprep.subr.bf16.mxu0 %v575
        %718 = vmatpush1.bf16.xpose.msra.mxu0 %v574
        %719 = vmatprep.subr.bf16.mxu0 %v579
        %720 = vmatpush1.bf16.xpose.msra.mxu0 %v578
        %721 = vmatprep.subr.bf16.mxu0 %v583
        %722 = vmatpush1.bf16.xpose.msra.mxu0 %v582
        %723 = vmatprep.subr.bf16.mxu0 %v587
        %724 = vmatpush1.bf16.xpose.msra.mxu0 %v586
        %725 = vmatprep.mubr.bf16.mxu0 %v327
        %726 = vmatmul.mubr.bf16.gmra.mrb[0].mxu0 %v326
        %v727 = vpop.f32.mrb[0].mxu0
        %v728 = vadd.f32 %v687, %v727
        %v729 = vpop.f32.mrb[0].mxu0
        %v730 = vadd.f32 %v689, %v729
        %v731 = vpop.f32.mrb[0].mxu0
        %v732 = vpop.f32.mrb[0].mxu0
        %733 = vdwg.mxu0
        %v734 = vadd.f32 %v250, %v728
        %v735 = vadd.f32 %v251, %v730
        %736 = vst [vmem:[#allocation2] sm:$0xff] %v734
        %737 = vst [vmem:[#allocation2 + $0x8] sm:$0xff] %v735
        // Predicated region
        $region37: #{cov_wrapper_forward.3} parent=31 // pred_check
          %p738 = pneg %p244
        $region38: #{cov_wrapper_forward.3} parent=31 // pred_check_branch
          %740 = sbr.rel (%p738) target = $region40
        $region39: #{cov_wrapper_forward.3} parent=31 // pred_region
          %v741 = vld [vmem:[#allocation2] sm:$0xff]
          %v742 = vld [vmem:[#allocation2 + $0x8] sm:$0xff]
          %v743 = vld [vmem:[%s241] sm:$0x3]
          %v745 = vlaneseq
          %v746 = vshrl.u32 %v745, 7
          %v747 = vsub.s32 0, %v746
          %v748 = vrot.slane %v743, %v747
          %v749 = vlaneseq
          %v750 = vshrl.u32 %v749, 7
          %v751 = vsub.s32 1, %v750
          %v752 = vrot.slane %v743, %v751
          %v755 = vadd.f32 %v741, %v748
          %v756 = vadd.f32 %v742, %v752
          %757 = vst [vmem:[%s219] sm:$0xff] %v755
          %758 = vst [vmem:[%s219 + $0x8] sm:$0xff] %v756
        $region40: #{cov_wrapper_forward.3} parent=31 // pred_fallthru
          _
        %s759 = sand.u32 %s117, 1
        %s760 = scalar_lea.sflag [#allocation4], %s759
        %s761 = sand.u32 %s117, 1
        %s762 = smul.addr %s761, 16
        %s763 = scalar_lea.vmem [#allocation3], %s762
        // Predicated region
        $region41: #{cov_wrapper_forward.3} parent=31 // pred_check
          %p764 = pneg %p127
        $region42: #{cov_wrapper_forward.3} parent=31 // pred_check_branch
          %766 = sbr.rel (%p764) target = $region44
        $region43: #{cov_wrapper_forward.3} parent=31 // pred_region
          %s767 = smul.u32 2, %s21
          %s769 = ssub.s32 256, 256
          %770 = vsyncadd %s760, %s769
          %s771 = smul.addr %s767, 128
          %s772 = scalar_lea.hbm %s3, %s771
          %s774 = sshll.u32 %s763, 4
          %s775 = int_to_ptr.vmem [resolvable:$true] %s774
          %777 = dma.vmem_to_hbm [thread:$0]  %s775, 256, %s772, %s760
        $region44: #{cov_wrapper_forward.3} parent=31 // pred_fallthru
          _
      $region32: #{cov_wrapper_forward.3} parent=5 // pred_fallthru
        _
      %p778 = scmp.le.s32.totalorder 2, %s12
      // Predicated region
      $region45: #{cov_wrapper_forward.3} parent=5 // pred_check
        %p779 = pneg %p778
      $region46: #{cov_wrapper_forward.3} parent=5 // pred_check_branch
        %781 = sbr.rel (%p779) target = $region48
      $region47: #{cov_wrapper_forward.3} parent=5 // pred_region
        %s782 = ssub.s32 %s12, 2
        // Predicated region
        $region49: #{cov_wrapper_forward.3} parent=47 // pred_check
          %p783 = pneg %p133
        $region50: #{cov_wrapper_forward.3} parent=47 // pred_check_branch
          %785 = sbr.rel (%p783) target = $region52
        $region51: #{cov_wrapper_forward.3} parent=47 // pred_region
          %s786 = sand.u32 %s118, 1
          %s787 = scalar_lea.sflag [#allocation4], %s786
          %s788 = sand.u32 %s118, 1
          %s789 = smul.addr %s788, 16
          %s790 = scalar_lea.vmem [#allocation3], %s789
          %791 = dma.done %s787, 256
        $region52: #{cov_wrapper_forward.3} parent=47 // pred_fallthru
          _
      $region48: #{cov_wrapper_forward.3} parent=5 // pred_fallthru
        _
    $region6: #{cov_wrapper_forward.3} parent=1 // loop_footer
      %s16 = sadd.s32 1, %s12
    $region7: #{cov_wrapper_forward.3} parent=1 // loop_footer_branch
      %11 = sbr.rel target = $region3
    $region8: #{cov_wrapper_forward.3} parent=1 // loop_exit
      _
    %792 = vsyncpa [#allocation4], 1
    %s793 = scalar_lea.sflag [#allocation4], 1
    %794 = vsyncpa %s793, 1

</llo_original>
